<compile_context>
chip_gen: v6e
topology: v6e:2x2x1
jax: 0.10.0
libtpu: 0.0.40
codegen_flags: <defaults>
</compile_context>

<pallas_src>
import functools

import jax
import jax.numpy as jnp
from jax.experimental import pallas as pl
from jax.experimental.pallas import tpu as pltpu

SUBLANE_PACK = 16     # bf16 activations pack 16 rows per vreg; also covers the 8-row floor
DEF_TILE_B = 1024     # large-batch tile (multiple of 8); ~85% of HBM roofline vs ~63% @256


def _round_up(x, m):
    return (x + m - 1) // m * m


def _pick_tile_b(batch, tile_b):
    """Clamp the batch tile to the real batch; keep >= 2 grid steps when possible."""
    b_ceil = _round_up(max(batch, 1), SUBLANE_PACK)
    t = min(_round_up(tile_b, SUBLANE_PACK), b_ceil)
    if b_ceil >= 2 * SUBLANE_PACK:
        # Cap at ceil(b/2): grid gets >= 2 steps so both v7x TensorCores are used.
        t = min(t, _round_up(pl.cdiv(b_ceil, 2), SUBLANE_PACK))
    return t


def bc_policy_kernel(x_ref, w1_ref, b1_ref, w2_ref, b2_ref, w3_ref, b3_ref, o_ref,
                     *, hidden_dtype):
    """One batch tile of Linear->ReLU->Linear->ReLU->Linear.

    Matmul operands are bf16 (MXU-native), accumulation is f32; hidden bias-add/ReLU
    run in `hidden_dtype` (bf16 on v6e/v7x, f32 on v5e); final logits are f32.
    """
    x = x_ref[...].astype(w1_ref.dtype)

    # Layer 1: Linear + ReLU
    h1 = jnp.dot(x, w1_ref[...], preferred_element_type=jnp.float32)
    h1 = jnp.maximum(h1.astype(hidden_dtype) + b1_ref[...].astype(hidden_dtype), 0)

    # Layer 2: Linear + ReLU
    h2 = jnp.dot(h1.astype(w2_ref.dtype), w2_ref[...], preferred_element_type=jnp.float32)
    h2 = jnp.maximum(h2.astype(hidden_dtype) + b2_ref[...].astype(hidden_dtype), 0)

    # Layer 3: Linear (logits, no activation); unpadded (tile_b, action_dim) store.
    logits = jnp.dot(h2.astype(w3_ref.dtype), w3_ref[...], preferred_element_type=jnp.float32)
    o_ref[...] = logits + b3_ref[...]


def discrete_bc_policy(state, params, *, tile_b=DEF_TILE_B, hidden_dtype=jnp.bfloat16,
                       single_buffer_weights=False):
    """state: (B, state_dim) f32.  params: (in, out) bf16 weights, (1, out) f32 biases.

    hidden_dtype: elementwise dtype for hidden bias-add/ReLU. Use jnp.float32 on v5e
      (its VPU has no bf16 datapath); bf16 elsewhere.
    single_buffer_weights: request single-buffered resident weights (pl.Buffered(1));
      useful on v7x when hidden is very large (weights otherwise double-buffered).
    """
    w1, b1, w2, b2, w3, b3 = (params[k] for k in ("w1", "b1", "w2", "b2", "w3", "b3"))
    B, state_dim = state.shape
    hidden = w1.shape[1]
    action_dim = w3.shape[1]

    tile_b = _pick_tile_b(B, tile_b)
    assert tile_b % 8 == 0, f"tile_b must be a multiple of 8, got {tile_b}"

    # Pad the batch to a multiple of the batch tile (padded rows sliced off below).
    b_pad = _round_up(max(B, 1), tile_b)
    if b_pad != B:
        state = jnp.pad(state, ((0, b_pad - B), (0, 0)))
    grid = (b_pad // tile_b,)

    # Weights/biases: constant block index -> DMA'd once, resident in VMEM across steps.
    def resident(a):
        if single_buffer_weights:
            return pl.BlockSpec(a.shape, lambda i: (0,) * a.ndim,
                                pipeline_mode=pl.Buffered(1))
        return pl.BlockSpec(a.shape, lambda i: (0,) * a.ndim)

    weight_bytes = sum(int(a.size) * a.dtype.itemsize for a in (w1, b1, w2, b2, w3, b3))
    tile_io_bytes = tile_b * (state_dim + action_dim) * 4           # f32 in/out tiles
    hidden_bytes = 2 * tile_b * hidden * 4                          # h1/h2 upper bound
    need = ((1 if single_buffer_weights else 2) * weight_bytes
            + 2 * tile_io_bytes + hidden_bytes)
    # Explicit scoped-VMEM limit (defaults are only 16/32 MiB), capped at 64 MiB so it
    # also fits v7x's 64 MiB/TC. v5e/v6e (128 MiB physical) can raise the cap if needed.
    vmem_limit = int(min(64 * 2**20, max(32 * 2**20, 2 * need)))

    flops = 2 * b_pad * (state_dim * hidden + hidden * hidden + hidden * action_dim)
    bytes_accessed = (int(state.size) * state.dtype.itemsize
                      + weight_bytes
                      + b_pad * action_dim * 4)

    out = pl.pallas_call(
        functools.partial(bc_policy_kernel, hidden_dtype=hidden_dtype),
        out_shape=jax.ShapeDtypeStruct((b_pad, action_dim), jnp.float32),
        grid=grid,
        in_specs=[
            pl.BlockSpec((tile_b, state_dim), lambda i: (i, 0)),    # batch-streamed input
            resident(w1), resident(b1),
            resident(w2), resident(b2),
            resident(w3), resident(b3),
        ],
        # Unpadded output: last block dim == full array dim (legal), so no 128-lane
        # padding, ~16x less writeback, and no post-kernel column slice.
        out_specs=pl.BlockSpec((tile_b, action_dim), lambda i: (i, 0)),
        compiler_params=pltpu.CompilerParams(
            dimension_semantics=("parallel",),      # shard batch tiles across TCs (v7x)
            vmem_limit_bytes=vmem_limit,
        ),
        cost_estimate=pl.CostEstimate(
            flops=flops, transcendentals=0, bytes_accessed=bytes_accessed),
    )(state, w1, b1, w2, b2, w3, b3)

    return out if b_pad == B else out[:B]


def init_params(key, state_dim, action_dim, hidden_size):
    """Deterministic synthetic init (uniform, like PyTorch's default Linear init).

    Weights are stored (in_features, out_features) in bf16 (MXU operands);
    biases stay f32 with shape (1, out_features) for broadcast.
    """
    ks = jax.random.split(key, 6)

    def lin(kw, kb, fan_in, fan_out):
        bound = 1.0 / jnp.sqrt(fan_in)
        w = jax.random.uniform(kw, (fan_in, fan_out), jnp.float32, -bound, bound)
        b = jax.random.uniform(kb, (1, fan_out), jnp.float32, -bound, bound)
        return w.astype(jnp.bfloat16), b

    w1, b1 = lin(ks[0], ks[1], state_dim, hidden_size)
    w2, b2 = lin(ks[2], ks[3], hidden_size, hidden_size)
    w3, b3 = lin(ks[4], ks[5], hidden_size, action_dim)
    return {"w1": w1, "b1": b1, "w2": w2, "b2": b2, "w3": w3, "b3": b3}


def ref_forward(state, params, hidden_dtype=jnp.bfloat16):
    """Pure-JAX reference mirroring the kernel's bf16-operand / f32-accumulate math."""
    w1, b1, w2, b2, w3, b3 = (params[k] for k in ("w1", "b1", "w2", "b2", "w3", "b3"))
    h = jnp.dot(state.astype(w1.dtype), w1, preferred_element_type=jnp.float32)
    h = jnp.maximum(h.astype(hidden_dtype) + b1.astype(hidden_dtype), 0)
    h = jnp.dot(h.astype(w2.dtype), w2, preferred_element_type=jnp.float32)
    h = jnp.maximum(h.astype(hidden_dtype) + b2.astype(hidden_dtype), 0)
    return jnp.dot(h.astype(w3.dtype), w3, preferred_element_type=jnp.float32) + b3


if __name__ == "__main__":
    key = jax.random.PRNGKey(0)
    batch, state_dim, action_dim, hidden_size = 8, 32, 8, 256

    kx, kp = jax.random.split(key)
    state = jax.random.normal(kx, (batch, state_dim), jnp.float32)
    params = init_params(kp, state_dim, action_dim, hidden_size)

    out = jax.jit(discrete_bc_policy)(state, params)
    jax.block_until_ready(out)

    ref = ref_forward(state, params)
    assert out.shape == (batch, action_dim)
    max_err = float(jnp.max(jnp.abs(out - ref)))
    assert jnp.allclose(out, ref, atol=1e-2, rtol=1e-2), max_err

    print("KERNEL_OK")
</pallas_src>

<mosaic_0001>
module attributes {stable_mosaic.version = 11 : i64} {
  func.func @bc_policy_kernel(%arg0: i32, %arg1: memref<16x32xf32, #tpu.memory_space<vmem>>, %arg2: memref<32x256xbf16, #tpu.memory_space<vmem>>, %arg3: memref<1x256xf32, #tpu.memory_space<vmem>>, %arg4: memref<256x256xbf16, #tpu.memory_space<vmem>>, %arg5: memref<1x256xf32, #tpu.memory_space<vmem>>, %arg6: memref<256x8xbf16, #tpu.memory_space<vmem>>, %arg7: memref<1x8xf32, #tpu.memory_space<vmem>>, %arg8: memref<16x8xf32, #tpu.memory_space<vmem>>) attributes {dimension_semantics = [#tpu.dimension_semantics<parallel>], iteration_bounds = array<i64: 1>, scalar_prefetch = 0 : i64, scratch_operands = 0 : i64, tpu.core_type = #tpu.core_type<tc>, window_params = [{transform_indices = @transform_0, window_bounds = array<i64: 16, 32>}, {pipeline_mode = #tpu.pipeline_mode<synchronous>, transform_indices = @transform_1, window_bounds = array<i64: 32, 256>}, {pipeline_mode = #tpu.pipeline_mode<synchronous>, transform_indices = @transform_2, window_bounds = array<i64: 1, 256>}, {pipeline_mode = #tpu.pipeline_mode<synchronous>, transform_indices = @transform_3, window_bounds = array<i64: 256, 256>}, {pipeline_mode = #tpu.pipeline_mode<synchronous>, transform_indices = @transform_4, window_bounds = array<i64: 1, 256>}, {pipeline_mode = #tpu.pipeline_mode<synchronous>, transform_indices = @transform_5, window_bounds = array<i64: 256, 8>}, {pipeline_mode = #tpu.pipeline_mode<synchronous>, transform_indices = @transform_6, window_bounds = array<i64: 1, 8>}, {transform_indices = @transform_7, window_bounds = array<i64: 16, 8>}]} {
    %c0 = arith.constant 0 : index
    %c0_0 = arith.constant 0 : index
    %0 = vector.load %arg1[%c0, %c0_0] : memref<16x32xf32, #tpu.memory_space<vmem>>, vector<16x32xf32>
    %1 = arith.truncf %0 : vector<16x32xf32> to vector<16x32xbf16>
    %c0_1 = arith.constant 0 : index
    %c0_2 = arith.constant 0 : index
    %2 = vector.load %arg2[%c0_1, %c0_2] : memref<32x256xbf16, #tpu.memory_space<vmem>>, vector<32x256xbf16>
    %cst = arith.constant dense<0.000000e+00> : vector<16x256xf32>
    %3 = tpu.matmul %1, %2, %cst {dimension_numbers = #tpu.dot_dimension_numbers<[1], [0], [0], [1], [0, 0, 1, 1], [], []>} : vector<16x32xbf16>, vector<32x256xbf16>, vector<16x256xf32> -> vector<16x256xf32>
    %4 = arith.truncf %3 : vector<16x256xf32> to vector<16x256xbf16>
    %c0_3 = arith.constant 0 : index
    %c0_4 = arith.constant 0 : index
    %5 = vector.load %arg3[%c0_3, %c0_4] : memref<1x256xf32, #tpu.memory_space<vmem>>, vector<1x256xf32>
    %6 = arith.truncf %5 : vector<1x256xf32> to vector<1x256xbf16>
    %7 = vector.broadcast %6 : vector<1x256xbf16> to vector<16x256xbf16>
    %8 = arith.addf %4, %7 : vector<16x256xbf16>
    %cst_5 = arith.constant 0.000000e+00 : bf16
    %9 = vector.broadcast %cst_5 : bf16 to vector<16x256xbf16>
    %10 = arith.maximumf %8, %9 : vector<16x256xbf16>
    %c0_6 = arith.constant 0 : index
    %c0_7 = arith.constant 0 : index
    %11 = vector.load %arg4[%c0_6, %c0_7] : memref<256x256xbf16, #tpu.memory_space<vmem>>, vector<256x256xbf16>
    %cst_8 = arith.constant dense<0.000000e+00> : vector<16x256xf32>
    %12 = tpu.matmul %10, %11, %cst_8 {dimension_numbers = #tpu.dot_dimension_numbers<[1], [0], [0], [1], [0, 0, 1, 1], [], []>} : vector<16x256xbf16>, vector<256x256xbf16>, vector<16x256xf32> -> vector<16x256xf32>
    %13 = arith.truncf %12 : vector<16x256xf32> to vector<16x256xbf16>
    %c0_9 = arith.constant 0 : index
    %c0_10 = arith.constant 0 : index
    %14 = vector.load %arg5[%c0_9, %c0_10] : memref<1x256xf32, #tpu.memory_space<vmem>>, vector<1x256xf32>
    %15 = arith.truncf %14 : vector<1x256xf32> to vector<1x256xbf16>
    %16 = vector.broadcast %15 : vector<1x256xbf16> to vector<16x256xbf16>
    %17 = arith.addf %13, %16 : vector<16x256xbf16>
    %cst_11 = arith.constant 0.000000e+00 : bf16
    %18 = vector.broadcast %cst_11 : bf16 to vector<16x256xbf16>
    %19 = arith.maximumf %17, %18 : vector<16x256xbf16>
    %c0_12 = arith.constant 0 : index
    %c0_13 = arith.constant 0 : index
    %20 = vector.load %arg6[%c0_12, %c0_13] : memref<256x8xbf16, #tpu.memory_space<vmem>>, vector<256x8xbf16>
    %cst_14 = arith.constant dense<0.000000e+00> : vector<16x8xf32>
    %21 = tpu.matmul %19, %20, %cst_14 {dimension_numbers = #tpu.dot_dimension_numbers<[1], [0], [0], [1], [0, 0, 1, 1], [], []>} : vector<16x256xbf16>, vector<256x8xbf16>, vector<16x8xf32> -> vector<16x8xf32>
    %c0_15 = arith.constant 0 : index
    %c0_16 = arith.constant 0 : index
    %22 = vector.load %arg7[%c0_15, %c0_16] : memref<1x8xf32, #tpu.memory_space<vmem>>, vector<1x8xf32>
    %23 = vector.broadcast %22 : vector<1x8xf32> to vector<16x8xf32>
    %24 = arith.addf %21, %23 : vector<16x8xf32>
    %c0_17 = arith.constant 0 : index
    %c0_18 = arith.constant 0 : index
    %25 = vector.load %arg8[%c0_17, %c0_18] : memref<16x8xf32, #tpu.memory_space<vmem>>, vector<16x8xf32>
    tpu.vector_store %arg8[%c0_17, %c0_18], %24 {strides = array<i32>} : memref<16x8xf32, #tpu.memory_space<vmem>>, vector<16x8xf32>,
    return
  }
  func.func @transform_0(%arg0: i32) -> (i32, i32) {
    %c0_i32 = arith.constant 0 : i32
    %c0_i32_0 = arith.constant 0 : i32
    return %arg0, %c0_i32 : i32, i32
  }
  func.func @transform_1(%arg0: i32) -> (i32, i32) {
    %c0_i32 = arith.constant 0 : i32
    %c0_i32_0 = arith.constant 0 : i32
    %c0_i32_1 = arith.constant 0 : i32
    return %c0_i32, %c0_i32_0 : i32, i32
  }
  func.func @transform_2(%arg0: i32) -> (i32, i32) {
    %c0_i32 = arith.constant 0 : i32
    %c0_i32_0 = arith.constant 0 : i32
    %c0_i32_1 = arith.constant 0 : i32
    return %c0_i32, %c0_i32_0 : i32, i32
  }
  func.func @transform_3(%arg0: i32) -> (i32, i32) {
    %c0_i32 = arith.constant 0 : i32
    %c0_i32_0 = arith.constant 0 : i32
    %c0_i32_1 = arith.constant 0 : i32
    return %c0_i32, %c0_i32_0 : i32, i32
  }
  func.func @transform_4(%arg0: i32) -> (i32, i32) {
    %c0_i32 = arith.constant 0 : i32
    %c0_i32_0 = arith.constant 0 : i32
    %c0_i32_1 = arith.constant 0 : i32
    return %c0_i32, %c0_i32_0 : i32, i32
  }
  func.func @transform_5(%arg0: i32) -> (i32, i32) {
    %c0_i32 = arith.constant 0 : i32
    %c0_i32_0 = arith.constant 0 : i32
    %c0_i32_1 = arith.constant 0 : i32
    return %c0_i32, %c0_i32_0 : i32, i32
  }
  func.func @transform_6(%arg0: i32) -> (i32, i32) {
    %c0_i32 = arith.constant 0 : i32
    %c0_i32_0 = arith.constant 0 : i32
    %c0_i32_1 = arith.constant 0 : i32
    return %c0_i32, %c0_i32_0 : i32, i32
  }
  func.func @transform_7(%arg0: i32) -> (i32, i32) {
    %c0_i32 = arith.constant 0 : i32
    %c0_i32_0 = arith.constant 0 : i32
    return %arg0, %c0_i32 : i32, i32
  }
}

</mosaic_0001>

<llo_original>
// kernel: discrete_bc_policy.1
$region0: #{discrete_bc_policy.1}
  #allocation0 [shape = 'u32[]', space=smem, size = 0x4, offset = 0x4, fixed_abs, tag = 'smem constant byte address 0x4 - core index']
  #allocation1 [shape = 'u32[144,128]{1,0:T(1,128)}', space=vmem, size = 0x12000, scoped, tag = 'internal scratch']
  %s0 = inlined_call_operand.vmem [shape: f32[16,32], index: 0, kind: input, shape index: {}]
  %s1 = inlined_call_operand.vmem [shape: bf16[32,256], index: 1, kind: input, shape index: {}]
  %s2 = inlined_call_operand.vmem [shape: f32[1,256], index: 2, kind: input, shape index: {}]
  %s3 = inlined_call_operand.hbm [shape: bf16[256,256], index: 3, kind: input, shape index: {}]
  %s4 = inlined_call_operand.vmem [shape: f32[1,256], index: 4, kind: input, shape index: {}]
  %s5 = inlined_call_operand.vmem [shape: bf16[256,8], index: 5, kind: input, shape index: {}]
  %s6 = inlined_call_operand.vmem [shape: f32[1,8], index: 6, kind: input, shape index: {}]
  %s7 = inlined_call_operand.vmem [shape: f32[16,8], index: 7, kind: output, shape index: {}]
  %s8 = sld [smem:[#allocation0]]
  $region42: #{discrete_bc_policy.1} parent=0
    _
  %s10 = ssub.s32 1, %s8
  %s11 = scalar_select 0, %s10, %s8
  $region1: #{discrete_bc_policy.1} parent=0
    #allocation2 [shape = 'u8[131072]{0}', space=vmem, size = 0x20000, scoped, tag = 'input window, operand 3, single buffered']
    #allocation3 [shape = 's32[1]{0}', space=sflag, size = 0x4, scoped, tag = 'scoped memory for discrete_bc_policy.1']
    %12 = vsyncpa [#allocation3], 0
    // Predicated region
    $region2: #{discrete_bc_policy.1} parent=1 // pred_check
      _
    $region3: #{discrete_bc_policy.1} parent=1 // pred_check_branch
      %14 = sbr.rel (0) target = $region5
    $region4: #{discrete_bc_policy.1} parent=1 // pred_region
      _
    $region5: #{discrete_bc_policy.1} parent=1 // pred_fallthru
      _
    // Predicated region
    $region6: #{discrete_bc_policy.1} parent=1 // pred_check
      _
    $region7: #{discrete_bc_policy.1} parent=1 // pred_check_branch
      %16 = sbr.rel (0) target = $region9
    $region8: #{discrete_bc_policy.1} parent=1 // pred_region
      _
    $region9: #{discrete_bc_policy.1} parent=1 // pred_fallthru
      _
    // Predicated region
    $region10: #{discrete_bc_policy.1} parent=1 // pred_check
      _
    $region11: #{discrete_bc_policy.1} parent=1 // pred_check_branch
      %18 = sbr.rel (0) target = $region13
    $region12: #{discrete_bc_policy.1} parent=1 // pred_region
      _
    $region13: #{discrete_bc_policy.1} parent=1 // pred_fallthru
      _
    // Predicated region
    $region14: #{discrete_bc_policy.1} parent=1 // pred_check
      _
    $region15: #{discrete_bc_policy.1} parent=1 // pred_check_branch
      %20 = sbr.rel (0) target = $region17
    $region16: #{discrete_bc_policy.1} parent=1 // pred_region
      %s22 = ssub.s32 4096, 4096
      %23 = vsyncadd [#allocation3], %s22
      %s24 = sshll.u32 [#allocation2], 4
      %s25 = int_to_ptr.vmem [resolvable:$true] %s24
      %30 = dma.hbm_to_vmem [thread:$0]  %s3, 4096, %s25, [#allocation3], 128, 128, 8
    $region17: #{discrete_bc_policy.1} parent=1 // pred_fallthru
      _
    // Predicated region
    $region18: #{discrete_bc_policy.1} parent=1 // pred_check
      _
    $region19: #{discrete_bc_policy.1} parent=1 // pred_check_branch
      %32 = sbr.rel (0) target = $region21
    $region20: #{discrete_bc_policy.1} parent=1 // pred_region
      _
    $region21: #{discrete_bc_policy.1} parent=1 // pred_fallthru
      _
    // Predicated region
    $region22: #{discrete_bc_policy.1} parent=1 // pred_check
      _
    $region23: #{discrete_bc_policy.1} parent=1 // pred_check_branch
      %34 = sbr.rel (0) target = $region25
    $region24: #{discrete_bc_policy.1} parent=1 // pred_region
      _
    $region25: #{discrete_bc_policy.1} parent=1 // pred_fallthru
      _
    // Predicated region
    $region26: #{discrete_bc_policy.1} parent=1 // pred_check
      _
    $region27: #{discrete_bc_policy.1} parent=1 // pred_check_branch
      %36 = sbr.rel (0) target = $region29
    $region28: #{discrete_bc_policy.1} parent=1 // pred_region
      _
    $region29: #{discrete_bc_policy.1} parent=1 // pred_fallthru
      _
    // Predicated region
    $region30: #{discrete_bc_policy.1} parent=1 // pred_check
      _
    $region31: #{discrete_bc_policy.1} parent=1 // pred_check_branch
      %38 = sbr.rel (0) target = $region33
    $region32: #{discrete_bc_policy.1} parent=1 // pred_region
      %39 = dma.done [#allocation3], 4096
    $region33: #{discrete_bc_policy.1} parent=1 // pred_fallthru
      _
    %v41 = vld [vmem:[%s0] sm:$0xff]
    %v42 = vld [vmem:[%s0 + $0x8] sm:$0xff]
    %v43 = vpack.c.bf16 %v42, %v41
    %v44 = vld [vmem:[%s1] sm:$0xff]
    %v45 = vld [vmem:[%s1 + $0x8] sm:$0xff]
    %v46 = vld [vmem:[%s1 + $0x10] sm:$0xff]
    %v47 = vld [vmem:[%s1 + $0x18] sm:$0xff]
    %v52 = vunpack.c.l.b16 %v44
    %v53 = vunpack.c.h.b16 %v44
    %v54 = vunpack.c.l.b16 %v45
    %v55 = vunpack.c.h.b16 %v45
    %v56 = vunpack.c.l.b16 %v46
    %v57 = vunpack.c.h.b16 %v46
    %v58 = vunpack.c.l.b16 %v47
    %v59 = vunpack.c.h.b16 %v47
    %v60 = vpack.c.b16 %v54, %v52
    %v61 = vpack.c.b16 %v55, %v53
    %v62 = vpack.c.b16 %v58, %v56
    %v63 = vpack.c.b16 %v59, %v57
    %vm68 = vcmask 261120
    %v70 = vsel %vm68, %v43, 0
    %72 = vmatprep.subr.bf16.mxu0 0
    %73 = vmatpush1.bf16.msra.mxu0 0
    %74 = vmatprep.subr.bf16.mxu0 0
    %75 = vmatpush1.bf16.msra.mxu0 0
    %76 = vmatprep.subr.bf16.mxu0 0
    %77 = vmatpush1.bf16.msra.mxu0 0
    %78 = vmatprep.subr.bf16.mxu0 0
    %79 = vmatpush1.bf16.msra.mxu0 0
    %80 = vmatprep.subr.bf16.mxu0 0
    %81 = vmatpush1.bf16.msra.mxu0 0
    %82 = vmatprep.subr.bf16.mxu0 0
    %83 = vmatpush1.bf16.msra.mxu0 0
    %84 = vmatprep.subr.bf16.mxu0 %v63
    %85 = vmatpush1.bf16.msra.mxu0 %v62
    %86 = vmatprep.subr.bf16.mxu0 %v61
    %87 = vmatpush1.bf16.msra.mxu0 %v60
    %88 = vmatprep.subr.bf16.mxu0 0
    %89 = vmatpush2.bf16.msra.mxu0 0
    %90 = vmatprep.subr.bf16.mxu0 0
    %91 = vmatpush2.bf16.msra.mxu0 0
    %92 = vmatprep.subr.bf16.mxu0 0
    %93 = vmatpush2.bf16.msra.mxu0 0
    %94 = vmatprep.subr.bf16.mxu0 0
    %95 = vmatpush2.bf16.msra.mxu0 0
    %96 = vmatprep.subr.bf16.mxu0 0
    %97 = vmatpush2.bf16.msra.mxu0 0
    %98 = vmatprep.subr.bf16.mxu0 0
    %99 = vmatpush2.bf16.msra.mxu0 0
    %100 = vmatprep.subr.bf16.mxu0 0
    %101 = vmatpush2.bf16.msra.mxu0 0
    %102 = vmatprep.subr.bf16.mxu0 0
    %103 = vmatpush2.bf16.msra.mxu0 0
    %104 = vmatprep.mubr.bf16.mxu0 0
    %105 = vmatmul.mubr.bf16.gmra.mxu0 %v70
    %v106 = vpop.f32.mrf.mxu0
    %v107 = vadd.f32 0.0, %v106
    %v108 = vpop.f32.mrf.mxu0
    %v109 = vadd.f32 0.0, %v108
    %v110 = vpop.f32.mrf.mxu0
    %v111 = vadd.f32 0.0, %v110
    %v112 = vpop.f32.mrf.mxu0
    %v113 = vadd.f32 0.0, %v112
    %114 = vdwg.mxu0
    %v115 = vpack.c.bf16 %v111, %v107
    %v116 = vpack.c.bf16 %v113, %v109
    %v117 = vld [vmem:[%s2] sm:$0x3]
    %v119 = vlaneseq
    %v120 = vshrl.u32 %v119, 7
    %v121 = vsub.s32 0, %v120
    %v122 = vrot.slane %v117, %v121
    %v123 = vlaneseq
    %v124 = vshrl.u32 %v123, 7
    %v125 = vsub.s32 1, %v124
    %v126 = vrot.slane %v117, %v125
    %v129 = vpack.c.bf16 %v122, %v122
    %v130 = vpack.c.bf16 %v126, %v126
    %v132 = vpack.i.b16 %v129, %v129
    %v134 = vlaneseq
    %v135 = vshrl.u32 %v134, 7
    %v136 = vsub.s32 0, %v135
    %v137 = vrot.slane %v132, %v136
    %v139 = vpack.i.b16 %v130, %v130
    %v141 = vlaneseq
    %v142 = vshrl.u32 %v141, 7
    %v143 = vsub.s32 0, %v142
    %v144 = vrot.slane %v139, %v143
    %v145 = vadd.bf16 %v115, %v137
    %v146 = vadd.bf16 %v116, %v144
    %v147 = vmax.bf16 %v145, 0
    %v148 = vmax.bf16 %v146, 0
    %v149 = vld [vmem:[#allocation2] sm:$0xff]
    %v150 = vld [vmem:[#allocation2 + $0x8] sm:$0xff]
    %v151 = vld [vmem:[#allocation2 + $0x10] sm:$0xff]
    %v152 = vld [vmem:[#allocation2 + $0x18] sm:$0xff]
    %v153 = vld [vmem:[#allocation2 + $0x20] sm:$0xff]
    %v154 = vld [vmem:[#allocation2 + $0x28] sm:$0xff]
    %v155 = vld [vmem:[#allocation2 + $0x30] sm:$0xff]
    %v156 = vld [vmem:[#allocation2 + $0x38] sm:$0xff]
    %v157 = vld [vmem:[#allocation2 + $0x40] sm:$0xff]
    %v158 = vld [vmem:[#allocation2 + $0x48] sm:$0xff]
    %v159 = vld [vmem:[#allocation2 + $0x50] sm:$0xff]
    %v160 = vld [vmem:[#allocation2 + $0x58] sm:$0xff]
    %v161 = vld [vmem:[#allocation2 + $0x60] sm:$0xff]
    %v162 = vld [vmem:[#allocation2 + $0x68] sm:$0xff]
    %v163 = vld [vmem:[#allocation2 + $0x70] sm:$0xff]
    %v164 = vld [vmem:[#allocation2 + $0x78] sm:$0xff]
    %v165 = vld [vmem:[#allocation2 + $0x80] sm:$0xff]
    %v166 = vld [vmem:[#allocation2 + $0x88] sm:$0xff]
    %v167 = vld [vmem:[#allocation2 + $0x90] sm:$0xff]
    %v168 = vld [vmem:[#allocation2 + $0x98] sm:$0xff]
    %v169 = vld [vmem:[#allocation2 + $0xa0] sm:$0xff]
    %v170 = vld [vmem:[#allocation2 + $0xa8] sm:$0xff]
    %v171 = vld [vmem:[#allocation2 + $0xb0] sm:$0xff]
    %v172 = vld [vmem:[#allocation2 + $0xb8] sm:$0xff]
    %v173 = vld [vmem:[#allocation2 + $0xc0] sm:$0xff]
    %v174 = vld [vmem:[#allocation2 + $0xc8] sm:$0xff]
    %v175 = vld [vmem:[#allocation2 + $0xd0] sm:$0xff]
    %v176 = vld [vmem:[#allocation2 + $0xd8] sm:$0xff]
    %v177 = vld [vmem:[#allocation2 + $0xe0] sm:$0xff]
    %v178 = vld [vmem:[#allocation2 + $0xe8] sm:$0xff]
    %v179 = vld [vmem:[#allocation2 + $0xf0] sm:$0xff]
    %v180 = vld [vmem:[#allocation2 + $0xf8] sm:$0xff]
    %v213 = vunpack.c.l.b16 %v149
    %v214 = vunpack.c.h.b16 %v149
    %v215 = vunpack.c.l.b16 %v150
    %v216 = vunpack.c.h.b16 %v150
    %v217 = vunpack.c.l.b16 %v151
    %v218 = vunpack.c.h.b16 %v151
    %v219 = vunpack.c.l.b16 %v152
    %v220 = vunpack.c.h.b16 %v152
    %v221 = vunpack.c.l.b16 %v153
    %v222 = vunpack.c.h.b16 %v153
    %v223 = vunpack.c.l.b16 %v154
    %v224 = vunpack.c.h.b16 %v154
    %v225 = vunpack.c.l.b16 %v155
    %v226 = vunpack.c.h.b16 %v155
    %v227 = vunpack.c.l.b16 %v156
    %v228 = vunpack.c.h.b16 %v156
    %v229 = vunpack.c.l.b16 %v157
    %v230 = vunpack.c.h.b16 %v157
    %v231 = vunpack.c.l.b16 %v158
    %v232 = vunpack.c.h.b16 %v158
    %v233 = vunpack.c.l.b16 %v159
    %v234 = vunpack.c.h.b16 %v159
    %v235 = vunpack.c.l.b16 %v160
    %v236 = vunpack.c.h.b16 %v160
    %v237 = vunpack.c.l.b16 %v161
    %v238 = vunpack.c.h.b16 %v161
    %v239 = vunpack.c.l.b16 %v162
    %v240 = vunpack.c.h.b16 %v162
    %v241 = vunpack.c.l.b16 %v163
    %v242 = vunpack.c.h.b16 %v163
    %v243 = vunpack.c.l.b16 %v164
    %v244 = vunpack.c.h.b16 %v164
    %v245 = vunpack.c.l.b16 %v165
    %v246 = vunpack.c.h.b16 %v165
    %v247 = vunpack.c.l.b16 %v166
    %v248 = vunpack.c.h.b16 %v166
    %v249 = vunpack.c.l.b16 %v167
    %v250 = vunpack.c.h.b16 %v167
    %v251 = vunpack.c.l.b16 %v168
    %v252 = vunpack.c.h.b16 %v168
    %v253 = vunpack.c.l.b16 %v169
    %v254 = vunpack.c.h.b16 %v169
    %v255 = vunpack.c.l.b16 %v170
    %v256 = vunpack.c.h.b16 %v170
    %v257 = vunpack.c.l.b16 %v171
    %v258 = vunpack.c.h.b16 %v171
    %v259 = vunpack.c.l.b16 %v172
    %v260 = vunpack.c.h.b16 %v172
    %v261 = vunpack.c.l.b16 %v173
    %v262 = vunpack.c.h.b16 %v173
    %v263 = vunpack.c.l.b16 %v174
    %v264 = vunpack.c.h.b16 %v174
    %v265 = vunpack.c.l.b16 %v175
    %v266 = vunpack.c.h.b16 %v175
    %v267 = vunpack.c.l.b16 %v176
    %v268 = vunpack.c.h.b16 %v176
    %v269 = vunpack.c.l.b16 %v177
    %v270 = vunpack.c.h.b16 %v177
    %v271 = vunpack.c.l.b16 %v178
    %v272 = vunpack.c.h.b16 %v178
    %v273 = vunpack.c.l.b16 %v179
    %v274 = vunpack.c.h.b16 %v179
    %v275 = vunpack.c.l.b16 %v180
    %v276 = vunpack.c.h.b16 %v180
    %v277 = vpack.c.b16 %v215, %v213
    %v278 = vpack.c.b16 %v216, %v214
    %v279 = vpack.c.b16 %v219, %v217
    %v280 = vpack.c.b16 %v220, %v218
    %v281 = vpack.c.b16 %v223, %v221
    %v282 = vpack.c.b16 %v224, %v222
    %v283 = vpack.c.b16 %v227, %v225
    %v284 = vpack.c.b16 %v228, %v226
    %v285 = vpack.c.b16 %v231, %v229
    %v286 = vpack.c.b16 %v232, %v230
    %v287 = vpack.c.b16 %v235, %v233
    %v288 = vpack.c.b16 %v236, %v234
    %v289 = vpack.c.b16 %v239, %v237
    %v290 = vpack.c.b16 %v240, %v238
    %v291 = vpack.c.b16 %v243, %v241
    %v292 = vpack.c.b16 %v244, %v242
    %v293 = vpack.c.b16 %v247, %v245
    %v294 = vpack.c.b16 %v248, %v246
    %v295 = vpack.c.b16 %v251, %v249
    %v296 = vpack.c.b16 %v252, %v250
    %v297 = vpack.c.b16 %v255, %v253
    %v298 = vpack.c.b16 %v256, %v254
    %v299 = vpack.c.b16 %v259, %v257
    %v300 = vpack.c.b16 %v260, %v258
    %v301 = vpack.c.b16 %v263, %v261
    %v302 = vpack.c.b16 %v264, %v262
    %v303 = vpack.c.b16 %v267, %v265
    %v304 = vpack.c.b16 %v268, %v266
    %v305 = vpack.c.b16 %v271, %v269
    %v306 = vpack.c.b16 %v272, %v270
    %v307 = vpack.c.b16 %v275, %v273
    %v308 = vpack.c.b16 %v276, %v274
    %341 = vmatprep.subr.bf16.mxu0 %v292
    %342 = vmatpush1.bf16.msra.mxu0 %v291
    %343 = vmatprep.subr.bf16.mxu0 %v290
    %344 = vmatpush1.bf16.msra.mxu0 %v289
    %345 = vmatprep.subr.bf16.mxu0 %v288
    %346 = vmatpush1.bf16.msra.mxu0 %v287
    %347 = vmatprep.subr.bf16.mxu0 %v286
    %348 = vmatpush1.bf16.msra.mxu0 %v285
    %349 = vmatprep.subr.bf16.mxu0 %v284
    %350 = vmatpush1.bf16.msra.mxu0 %v283
    %351 = vmatprep.subr.bf16.mxu0 %v282
    %352 = vmatpush1.bf16.msra.mxu0 %v281
    %353 = vmatprep.subr.bf16.mxu0 %v280
    %354 = vmatpush1.bf16.msra.mxu0 %v279
    %355 = vmatprep.subr.bf16.mxu0 %v278
    %356 = vmatpush1.bf16.msra.mxu0 %v277
    %357 = vmatprep.subr.bf16.mxu0 %v308
    %358 = vmatpush2.bf16.msra.mxu0 %v307
    %359 = vmatprep.subr.bf16.mxu0 %v306
    %360 = vmatpush2.bf16.msra.mxu0 %v305
    %361 = vmatprep.subr.bf16.mxu0 %v304
    %362 = vmatpush2.bf16.msra.mxu0 %v303
    %363 = vmatprep.subr.bf16.mxu0 %v302
    %364 = vmatpush2.bf16.msra.mxu0 %v301
    %365 = vmatprep.subr.bf16.mxu0 %v300
    %366 = vmatpush2.bf16.msra.mxu0 %v299
    %367 = vmatprep.subr.bf16.mxu0 %v298
    %368 = vmatpush2.bf16.msra.mxu0 %v297
    %369 = vmatprep.subr.bf16.mxu0 %v296
    %370 = vmatpush2.bf16.msra.mxu0 %v295
    %371 = vmatprep.subr.bf16.mxu0 %v294
    %372 = vmatpush2.bf16.msra.mxu0 %v293
    %373 = vmatprep.mubr.bf16.mxu0 %v148
    %374 = vmatmul.mubr.bf16.gmra.mxu0 %v147
    %v375 = vpop.f32.mrf.mxu0
    %v376 = vadd.f32 0.0, %v375
    %v377 = vpop.f32.mrf.mxu0
    %v378 = vadd.f32 0.0, %v377
    %v379 = vpop.f32.mrf.mxu0
    %v380 = vadd.f32 0.0, %v379
    %v381 = vpop.f32.mrf.mxu0
    %v382 = vadd.f32 0.0, %v381
    %383 = vdwg.mxu0
    %v384 = vpack.c.bf16 %v380, %v376
    %v385 = vpack.c.bf16 %v382, %v378
    %v386 = vld [vmem:[%s4] sm:$0x3]
    %v388 = vlaneseq
    %v389 = vshrl.u32 %v388, 7
    %v390 = vsub.s32 0, %v389
    %v391 = vrot.slane %v386, %v390
    %v392 = vlaneseq
    %v393 = vshrl.u32 %v392, 7
    %v394 = vsub.s32 1, %v393
    %v395 = vrot.slane %v386, %v394
    %v398 = vpack.c.bf16 %v391, %v391
    %v399 = vpack.c.bf16 %v395, %v395
    %v401 = vpack.i.b16 %v398, %v398
    %v403 = vlaneseq
    %v404 = vshrl.u32 %v403, 7
    %v405 = vsub.s32 0, %v404
    %v406 = vrot.slane %v401, %v405
    %v408 = vpack.i.b16 %v399, %v399
    %v410 = vlaneseq
    %v411 = vshrl.u32 %v410, 7
    %v412 = vsub.s32 0, %v411
    %v413 = vrot.slane %v408, %v412
    %v414 = vadd.bf16 %v384, %v406
    %v415 = vadd.bf16 %v385, %v413
    %v416 = vmax.bf16 %v414, 0
    %v417 = vmax.bf16 %v415, 0
    %v418 = vld [vmem:[%s5] sm:$0xf]
    %v419 = vld [vmem:[%s5 + $0x4] sm:$0xf]
    %v420 = vld [vmem:[%s5 + $0x8] sm:$0xf]
    %v421 = vld [vmem:[%s5 + $0xc] sm:$0xf]
    %v422 = vld [vmem:[%s5 + $0x10] sm:$0xf]
    %v423 = vld [vmem:[%s5 + $0x14] sm:$0xf]
    %v424 = vld [vmem:[%s5 + $0x18] sm:$0xf]
    %v425 = vld [vmem:[%s5 + $0x1c] sm:$0xf]
    %v426 = vld [vmem:[%s5 + $0x20] sm:$0xf]
    %v427 = vld [vmem:[%s5 + $0x24] sm:$0xf]
    %v428 = vld [vmem:[%s5 + $0x28] sm:$0xf]
    %v429 = vld [vmem:[%s5 + $0x2c] sm:$0xf]
    %v430 = vld [vmem:[%s5 + $0x30] sm:$0xf]
    %v431 = vld [vmem:[%s5 + $0x34] sm:$0xf]
    %v432 = vld [vmem:[%s5 + $0x38] sm:$0xf]
    %v433 = vld [vmem:[%s5 + $0x3c] sm:$0xf]
    %v434 = vld [vmem:[%s5 + $0x40] sm:$0xf]
    %v435 = vld [vmem:[%s5 + $0x44] sm:$0xf]
    %v436 = vld [vmem:[%s5 + $0x48] sm:$0xf]
    %v437 = vld [vmem:[%s5 + $0x4c] sm:$0xf]
    %v438 = vld [vmem:[%s5 + $0x50] sm:$0xf]
    %v439 = vld [vmem:[%s5 + $0x54] sm:$0xf]
    %v440 = vld [vmem:[%s5 + $0x58] sm:$0xf]
    %v441 = vld [vmem:[%s5 + $0x5c] sm:$0xf]
    %v442 = vld [vmem:[%s5 + $0x60] sm:$0xf]
    %v443 = vld [vmem:[%s5 + $0x64] sm:$0xf]
    %v444 = vld [vmem:[%s5 + $0x68] sm:$0xf]
    %v445 = vld [vmem:[%s5 + $0x6c] sm:$0xf]
    %v446 = vld [vmem:[%s5 + $0x70] sm:$0xf]
    %v447 = vld [vmem:[%s5 + $0x74] sm:$0xf]
    %v448 = vld [vmem:[%s5 + $0x78] sm:$0xf]
    %v449 = vld [vmem:[%s5 + $0x7c] sm:$0xf]
    %v450 = vld [vmem:[%s6] sm:$0x1]
    %v452 = vlaneseq
    %v453 = vshrl.u32 %v452, 7
    %v454 = vsub.s32 0, %v453
    %v455 = vrot.slane %v450, %v454
    %v489 = vunpack.c.l.b16 %v418
    %v490 = vunpack.c.l.b16 %v419
    %v491 = vunpack.c.l.b16 %v420
    %v492 = vunpack.c.l.b16 %v421
    %v493 = vunpack.c.l.b16 %v422
    %v494 = vunpack.c.l.b16 %v423
    %v495 = vunpack.c.l.b16 %v424
    %v496 = vunpack.c.l.b16 %v425
    %v497 = vunpack.c.l.b16 %v426
    %v498 = vunpack.c.l.b16 %v427
    %v499 = vunpack.c.l.b16 %v428
    %v500 = vunpack.c.l.b16 %v429
    %v501 = vunpack.c.l.b16 %v430
    %v502 = vunpack.c.l.b16 %v431
    %v503 = vunpack.c.l.b16 %v432
    %v504 = vunpack.c.l.b16 %v433
    %v505 = vunpack.c.l.b16 %v434
    %v506 = vunpack.c.l.b16 %v435
    %v507 = vunpack.c.l.b16 %v436
    %v508 = vunpack.c.l.b16 %v437
    %v509 = vunpack.c.l.b16 %v438
    %v510 = vunpack.c.l.b16 %v439
    %v511 = vunpack.c.l.b16 %v440
    %v512 = vunpack.c.l.b16 %v441
    %v513 = vunpack.c.l.b16 %v442
    %v514 = vunpack.c.l.b16 %v443
    %v515 = vunpack.c.l.b16 %v444
    %v516 = vunpack.c.l.b16 %v445
    %v517 = vunpack.c.l.b16 %v446
    %v518 = vunpack.c.l.b16 %v447
    %v519 = vunpack.c.l.b16 %v448
    %v520 = vunpack.c.l.b16 %v449
    %v521 = vpack.c.b16 %v490, %v489
    %v522 = vpack.c.b16 %v492, %v491
    %v523 = vpack.c.b16 %v494, %v493
    %v524 = vpack.c.b16 %v496, %v495
    %v525 = vpack.c.b16 %v498, %v497
    %v526 = vpack.c.b16 %v500, %v499
    %v527 = vpack.c.b16 %v502, %v501
    %v528 = vpack.c.b16 %v504, %v503
    %v529 = vpack.c.b16 %v506, %v505
    %v530 = vpack.c.b16 %v508, %v507
    %v531 = vpack.c.b16 %v510, %v509
    %v532 = vpack.c.b16 %v512, %v511
    %v533 = vpack.c.b16 %v514, %v513
    %v534 = vpack.c.b16 %v516, %v515
    %v535 = vpack.c.b16 %v518, %v517
    %v536 = vpack.c.b16 %v520, %v519
    %553 = vmatprep.subr.bf16.mxu0 0
    %554 = vmatpush1.bf16.msra.mxu0 %v528
    %555 = vmatprep.subr.bf16.mxu0 0
    %556 = vmatpush1.bf16.msra.mxu0 %v527
    %557 = vmatprep.subr.bf16.mxu0 0
    %558 = vmatpush1.bf16.msra.mxu0 %v526
    %559 = vmatprep.subr.bf16.mxu0 0
    %560 = vmatpush1.bf16.msra.mxu0 %v525
    %561 = vmatprep.subr.bf16.mxu0 0
    %562 = vmatpush1.bf16.msra.mxu0 %v524
    %563 = vmatprep.subr.bf16.mxu0 0
    %564 = vmatpush1.bf16.msra.mxu0 %v523
    %565 = vmatprep.subr.bf16.mxu0 0
    %566 = vmatpush1.bf16.msra.mxu0 %v522
    %567 = vmatprep.subr.bf16.mxu0 0
    %568 = vmatpush1.bf16.msra.mxu0 %v521
    %569 = vmatprep.subr.bf16.mxu0 0
    %570 = vmatpush2.bf16.msra.mxu0 %v536
    %571 = vmatprep.subr.bf16.mxu0 0
    %572 = vmatpush2.bf16.msra.mxu0 %v535
    %573 = vmatprep.subr.bf16.mxu0 0
    %574 = vmatpush2.bf16.msra.mxu0 %v534
    %575 = vmatprep.subr.bf16.mxu0 0
    %576 = vmatpush2.bf16.msra.mxu0 %v533
    %577 = vmatprep.subr.bf16.mxu0 0
    %578 = vmatpush2.bf16.msra.mxu0 %v532
    %579 = vmatprep.subr.bf16.mxu0 0
    %580 = vmatpush2.bf16.msra.mxu0 %v531
    %581 = vmatprep.subr.bf16.mxu0 0
    %582 = vmatpush2.bf16.msra.mxu0 %v530
    %583 = vmatprep.subr.bf16.mxu0 0
    %584 = vmatpush2.bf16.msra.mxu0 %v529
    %585 = vmatprep.mubr.bf16.mxu0 %v417
    %586 = vmatmul.mubr.bf16.gmra.mxu0 %v416
    %v587 = vpop.f32.mrf.mxu0
    %v588 = vadd.f32 %v455, %v587
    %v589 = vpop.f32.mrf.mxu0
    %v590 = vpop.f32.mrf.mxu0
    %v591 = vadd.f32 %v455, %v590
    %v592 = vpop.f32.mrf.mxu0
    %593 = vdwg.mxu0
    %vm594 = vcmask 64512
    %595 = vst.msk [vmem:[%s7] sm:$0xff] %vm594, %v588
    %596 = vst.msk [vmem:[%s7 + $0x8] sm:$0xff] %vm594, %v591
    // Predicated region
    $region34: #{discrete_bc_policy.1} parent=1 // pred_check
      _
    $region35: #{discrete_bc_policy.1} parent=1 // pred_check_branch
      %598 = sbr.rel (0) target = $region37
    $region36: #{discrete_bc_policy.1} parent=1 // pred_region
      _
    $region37: #{discrete_bc_policy.1} parent=1 // pred_fallthru
      _
    // Predicated region
    $region38: #{discrete_bc_policy.1} parent=1 // pred_check
      _
    $region39: #{discrete_bc_policy.1} parent=1 // pred_check_branch
      %600 = sbr.rel (0) target = $region41
    $region40: #{discrete_bc_policy.1} parent=1 // pred_region
      _
    $region41: #{discrete_bc_policy.1} parent=1 // pred_fallthru
      _
    %601 = vsyncpa [#allocation3], 1

</llo_original>
